<compile_context>
chip_gen: v7x
topology: tpu7x:2x2x1
jax: 0.10.0
libtpu: 0.0.40
codegen_flags: <defaults>
</compile_context>

<pallas_src>
import jax
import jax.numpy as jnp
from jax import lax
from jax.experimental import pallas as pl
from jax.experimental.pallas import tpu as pltpu

# ---- problem sizes (small, consistent with the module) ----
IN_DIM = 128
HID = 32
N_HEADS = 4
OUT_DIM = HID * N_HEADS      # 128
N_SRC = 16                   # number of source nodes per graph
N_DST = 8                    # number_of_dst_nodes() (first N_DST src nodes)
B_GRAPHS = 4                 # batch of graphs, one grid step each

NEG_SLOPE = 0.2              # LeakyReLU
LN_EPS = 1e-5                # nn.LayerNorm default
BIG_NEG = -1e30              # additive mask value for non-edges

# ---- resident f32 parameter-slab row offsets (all 8-aligned) ----
ROW_P = 0                                   # 8 rows of small per-feature params
ROW_ALR = 8                                 # 64 rows: block-diag attn_l (32) then attn_r (32)
ROW_HM = ROW_ALR + 2 * N_HEADS * N_DST      # 72: head-block fold mask  [32, 128]
ROW_EM = ROW_HM + N_HEADS * N_DST           # 104: er selector mask      [32, 128] (lanes 0..15)
PRM_ROWS = ROW_EM + N_HEADS * N_DST         # 136

# ---- per-graph bf16 slab rows ----
G_FEAT = 0                                  # 16 rows of node features
G_BIAS = N_SRC                              # 8 rows of adjacency bias (lanes 0..15)
G_ROWS = N_SRC + N_DST                      # 24


def gat_kernel(g_ref, prm_ref, w_ref, out_ref):
    # ---- per-graph slab (bf16, pipelined per grid step) ----
    feat = g_ref[G_FEAT:G_FEAT + N_SRC, :]                                 # [16,128] bf16
    bias8 = g_ref[G_BIAS:G_BIAS + N_DST, 0:N_SRC].astype(jnp.float32)      # [8,16]

    # ---- resident parameter slab (f32, DMA'd once for the whole grid) ----
    p = prm_ref[ROW_P:ROW_P + 8, :]                                        # [8,128]
    alr = prm_ref[ROW_ALR:ROW_ALR + 2 * N_HEADS * N_DST, :]                # [64,128]
    hmask = prm_ref[ROW_HM:ROW_HM + N_HEADS * N_DST, :]                    # [32,128]
    ermask = prm_ref[ROW_EM:ROW_EM + N_HEADS * N_DST, 0:N_SRC]             # [32,16]

    b_emb = p[0:1, :]
    b_skip = p[1:2, :]
    gamma = p[2:3, :]
    beta = p[3:4, :]
    wg_a = p[4:5, :]          # w_gate[0] + w_gate[2]
    wg_b = p[5:6, :]          # w_gate[1] - w_gate[2]
    b_gate = p[6:7, 0:1]      # scalar, broadcast row in the slab
    alpha = p[7:8, :]         # PReLU slope, broadcast row

    # ---- fused emb_src + skip_feat linear: one bf16 MXU pass, f32 accum ----
    y = jnp.dot(feat, w_ref[...], preferred_element_type=jnp.float32)      # [16,256]
    feat_src = y[:, :OUT_DIM] + b_emb                                       # [16,128] f32
    skip = y[:N_DST, OUT_DIM:2 * OUT_DIM] + b_skip                          # [8,128]  f32

    # ---- attention logits: one MXU pass covers el (rows 0..31) and the
    #      er candidates (rows 32..63); er extracted with a selector mask ----
    attn = lax.dot_general(alr, feat_src, (((1,), (1,)), ((), ())),
                           preferred_element_type=jnp.float32)              # [64,16]
    el_part = attn[0:N_HEADS * N_DST, :]                                    # [32,16]
    er_col = jnp.sum(attn[N_HEADS * N_DST:2 * N_HEADS * N_DST, :] * ermask,
                     axis=-1, keepdims=True)                                # [32,1]

    e = el_part + er_col                                                    # [32,16]
    e = jnp.maximum(e, NEG_SLOPE * e)                  # LeakyReLU (0 < slope < 1)
    e = e + jnp.concatenate([bias8, bias8, bias8, bias8], axis=0)  # -1e30 on non-edges

    # ---- masked edge-softmax, all heads batched on the sublane axis ----
    m = jnp.max(e, axis=-1, keepdims=True)
    pexp = jnp.exp(e - m)                 # exp(-1e30) underflows to exactly 0
    denom = jnp.sum(pexp, axis=-1, keepdims=True)
    a = pexp * pl.reciprocal(denom, approx=True)                            # [32,16]

    # ---- aggregation: one matmul + precomputed head-block fold mask ----
    r_full = jnp.dot(a, feat_src, preferred_element_type=jnp.float32)       # [32,128]
    r_m = r_full * hmask
    rst = (r_m[0 * N_DST:1 * N_DST, :] + r_m[1 * N_DST:2 * N_DST, :]
           + r_m[2 * N_DST:3 * N_DST, :] + r_m[3 * N_DST:4 * N_DST, :])     # [8,128]

    # ---- gated skip connection (gate weights folded in prepare_params) ----
    gl = (jnp.sum(rst * wg_a, axis=-1, keepdims=True)
          + jnp.sum(skip * wg_b, axis=-1, keepdims=True)
          + b_gate)                                                         # [8,1]
    gate = jax.nn.sigmoid(gl)
    mixed = skip + gate * (rst - skip)

    # ---- LayerNorm: variance from two independent reduces (E[x^2]-E[x]^2) ----
    s1 = jnp.sum(mixed, axis=-1, keepdims=True)
    s2 = jnp.sum(mixed * mixed, axis=-1, keepdims=True)
    mu = s1 * (1.0 / OUT_DIM)
    var = s2 * (1.0 / OUT_DIM) - mu * mu
    yln = (mixed - mu) * lax.rsqrt(var + LN_EPS) * gamma + beta

    # ---- PReLU (single learnable slope) ----
    out_ref[...] = jnp.where(yln >= 0.0, yln, alpha * yln)


def prepare_params(params):
    """One-time packing of all parameter-derived data (hoisted out of the
    per-call forward path). Returns (resident f32 slab, fused bf16 weights)."""
    eye_h = jnp.eye(N_HEADS, dtype=jnp.float32)
    # block-diagonal attention rows: al_bd[h, h'*HID+k] = attn_l[h,k] iff h'==h
    al_bd = (eye_h[:, :, None] * params["attn_l"][None, :, :]).reshape(N_HEADS, OUT_DIM)
    ar_bd = (eye_h[:, :, None] * params["attn_r"][None, :, :]).reshape(N_HEADS, OUT_DIM)
    al_rep = jnp.repeat(al_bd, N_DST, axis=0)      # [32,128], row h*N_DST+i = al_bd[h]
    ar_rep = jnp.repeat(ar_bd, N_DST, axis=0)      # [32,128]

    p_small = jnp.concatenate([
        params["b_emb"], params["b_skip"], params["gamma"], params["beta"],
        (params["w_gate"][0] + params["w_gate"][2])[None, :],   # wg_a
        (params["w_gate"][1] - params["w_gate"][2])[None, :],   # wg_b
        jnp.broadcast_to(params["b_gate"], (1, OUT_DIM)),
        jnp.broadcast_to(params["alpha"], (1, OUT_DIM)),
    ], axis=0)                                     # [8,128]

    rows = jnp.arange(N_HEADS * N_DST)
    # head-block fold mask: hmask[r,c] = 1 iff head(row r) == head(col c)
    hmask = ((rows[:, None] // N_DST)
             == (jnp.arange(OUT_DIM)[None, :] // HID)).astype(jnp.float32)  # [32,128]
    # er selector: ermask[r,j] = 1 iff j == (r mod N_DST)
    ermask = (jnp.arange(N_SRC)[None, :]
              == (rows[:, None] % N_DST)).astype(jnp.float32)               # [32,16]
    ermask = jnp.pad(ermask, ((0, 0), (0, OUT_DIM - N_SRC)))                # [32,128]

    prm = jnp.concatenate([p_small, al_rep, ar_rep, hmask, ermask], axis=0)  # [136,128]
    w_big = jnp.concatenate([params["w_emb"], params["w_skip"]],
                            axis=1).astype(jnp.bfloat16)                     # [128,256] bf16
    return prm, w_big


@jax.jit
def gat_forward(feat, adj, prm, w_big):
    """feat: [B, N_SRC, IN_DIM] f32, adj: [B, N_DST, N_SRC] dense adjacency.

    Per-call wrapper work is only the per-graph slab packing (bf16 cast +
    adjacency bias); all parameter packing lives in prepare_params().
    """
    b = feat.shape[0]
    bias = jnp.where(adj > 0.0, 0.0, BIG_NEG).astype(jnp.bfloat16)           # [B,8,16]
    bias = jnp.pad(bias, ((0, 0), (0, 0), (0, IN_DIM - N_SRC)))              # [B,8,128]
    gslab = jnp.concatenate([feat.astype(jnp.bfloat16), bias], axis=1)       # [B,24,128]

    # TODO(synk): for large B, stack several graphs' feats per grid step (block-
    # diagonal attention) so the fused linear fills the MXU M dim (128/256 rows).
    return pl.pallas_call(
        gat_kernel,
        out_shape=jax.ShapeDtypeStruct((b, N_DST, OUT_DIM), jnp.float32),
        grid=(b,),
        in_specs=[
            # per-graph [feat | adj-bias] slab: pipelined, one DMA per step
            pl.BlockSpec((None, G_ROWS, IN_DIM), lambda i: (i, 0, 0)),
            # resident parameter slab: same block every step -> DMA'd once
            pl.BlockSpec((PRM_ROWS, OUT_DIM), lambda i: (0, 0)),
            # resident fused [w_emb | w_skip] (bf16): DMA'd once
            pl.BlockSpec((IN_DIM, 2 * OUT_DIM), lambda i: (0, 0)),
        ],
        out_specs=pl.BlockSpec((None, N_DST, OUT_DIM), lambda i: (i, 0, 0)),
        compiler_params=pltpu.CompilerParams(
            dimension_semantics=("parallel",)),
    )(gslab, prm, w_big)


def reference_forward(feat, adj, p):
    """Pure-JAX reference (dense-adjacency reformulation of the DGL graph ops).

    The two linear projections use bf16 operands / f32 accumulation to mirror
    the kernel's MXU precision choice; everything else is f32, so the
    tolerance check validates the graph math rather than the dtype choice.
    """
    hp = lax.Precision.HIGHEST
    bf = jnp.bfloat16
    fs = jnp.dot(feat.astype(bf), p["w_emb"].astype(bf),
                 preferred_element_type=jnp.float32) + p["b_emb"]
    fs3 = fs.reshape(N_SRC, N_HEADS, HID)
    el = (fs3 * p["attn_l"][None]).sum(-1)                          # [N_SRC, H]
    er = (fs3[:N_DST] * p["attn_r"][None]).sum(-1)                  # [N_DST, H]
    e = el[None, :, :] + er[:, None, :]                             # [N_DST, N_SRC, H]
    e = jnp.where(e >= 0.0, e, NEG_SLOPE * e)
    mask = adj[:, :, None] > 0.0
    e = jnp.where(mask, e, BIG_NEG)
    m = e.max(axis=1, keepdims=True)
    pe = jnp.where(mask, jnp.exp(e - m), 0.0)
    a = pe / pe.sum(axis=1, keepdims=True)
    rst = jnp.einsum("ijh,jhd->ihd", a, fs3, precision=hp).reshape(N_DST, OUT_DIM)
    skip = jnp.dot(feat[:N_DST].astype(bf), p["w_skip"].astype(bf),
                   preferred_element_type=jnp.float32) + p["b_skip"]
    gl = ((rst * p["w_gate"][0]).sum(-1, keepdims=True)
          + (skip * p["w_gate"][1]).sum(-1, keepdims=True)
          + ((rst - skip) * p["w_gate"][2]).sum(-1, keepdims=True)
          + p["b_gate"])
    g = jax.nn.sigmoid(gl)
    mixed = g * rst + (1.0 - g) * skip
    mu = mixed.mean(-1, keepdims=True)
    var = ((mixed - mu) ** 2).mean(-1, keepdims=True)
    y = (mixed - mu) / jnp.sqrt(var + LN_EPS) * p["gamma"] + p["beta"]
    return jnp.where(y >= 0.0, y, p["alpha"] * y)


def make_params(key):
    ks = jax.random.split(key, 8)
    gain = 2.0 ** 0.5  # relu gain, as in reset_parameters / xavier_normal_
    xav_attn = gain * (2.0 / (HID + N_HEADS)) ** 0.5
    params = {
        "w_emb": jax.random.normal(ks[0], (IN_DIM, OUT_DIM), jnp.float32)
                 * (1.0 / IN_DIM ** 0.5),
        "b_emb": jax.random.normal(ks[1], (1, OUT_DIM), jnp.float32) * 0.01,
        "attn_l": jax.random.normal(ks[2], (N_HEADS, HID), jnp.float32) * xav_attn,
        "attn_r": jax.random.normal(ks[3], (N_HEADS, HID), jnp.float32) * xav_attn,
        "w_skip": jax.random.normal(ks[4], (IN_DIM, OUT_DIM), jnp.float32)
                  * (1.0 / IN_DIM ** 0.5),
        "b_skip": jax.random.normal(ks[5], (1, OUT_DIM), jnp.float32) * 0.01,
        # gate Linear(3*128 -> 1): weight split into [rst | skip | rst-skip] rows
        "w_gate": jax.random.normal(ks[6], (3, OUT_DIM), jnp.float32)
                  * (1.0 / (3 * OUT_DIM) ** 0.5),
        "b_gate": jnp.zeros((1, 1), jnp.float32),
        "gamma": jnp.ones((1, OUT_DIM), jnp.float32),
        "beta": jnp.zeros((1, OUT_DIM), jnp.float32),
        "alpha": jnp.full((1, 1), 0.25, jnp.float32),  # PReLU init
    }
    return params, ks[7]


if __name__ == "__main__":
    key = jax.random.PRNGKey(0)
    params, key = make_params(key)
    prm, w_big = prepare_params(params)          # one-time parameter packing

    k_feat, k_adj = jax.random.split(key)
    feat = jax.random.normal(k_feat, (B_GRAPHS, N_SRC, IN_DIM), jnp.float32)

    # deterministic dense adjacency; guarantee >= 1 edge per dst row
    adj = (jax.random.uniform(k_adj, (B_GRAPHS, N_DST, N_SRC)) > 0.5).astype(jnp.float32)
    d = jnp.arange(N_DST)
    adj = adj.at[:, d, d].set(1.0)

    out = gat_forward(feat, adj, prm, w_big)
    out = jax.block_until_ready(out)

    ref = jax.vmap(reference_forward, in_axes=(0, 0, None))(feat, adj, params)
    assert out.shape == (B_GRAPHS, N_DST, OUT_DIM)
    assert bool(jnp.allclose(out, ref, atol=1e-2, rtol=1e-2)), (
        f"max abs err {float(jnp.max(jnp.abs(out - ref)))}")

    print("KERNEL_OK")
</pallas_src>

<mosaic_0001>
module attributes {stable_mosaic.version = 11 : i64} {
  func.func @gat_kernel(%arg0: i32, %arg1: memref<1x24x128xbf16, #tpu.memory_space<vmem>>, %arg2: memref<136x128xf32, #tpu.memory_space<vmem>>, %arg3: memref<128x256xbf16, #tpu.memory_space<vmem>>, %arg4: memref<1x8x128xf32, #tpu.memory_space<vmem>>) attributes {dimension_semantics = [#tpu.dimension_semantics<parallel>], iteration_bounds = array<i64: 4>, scalar_prefetch = 0 : i64, scratch_operands = 0 : i64, tpu.core_type = #tpu.core_type<tc>, window_params = [{transform_indices = @transform_0, window_bounds = array<i64: 1, 24, 128>}, {pipeline_mode = #tpu.pipeline_mode<synchronous>, transform_indices = @transform_1, window_bounds = array<i64: 136, 128>}, {pipeline_mode = #tpu.pipeline_mode<synchronous>, transform_indices = @transform_2, window_bounds = array<i64: 128, 256>}, {transform_indices = @transform_3, window_bounds = array<i64: 1, 8, 128>}]} {
    %c0 = arith.constant 0 : index
    %c0_0 = arith.constant 0 : index
    %c0_1 = arith.constant 0 : index
    %0 = vector.load %arg1[%c0, %c0_0, %c0_1] : memref<1x24x128xbf16, #tpu.memory_space<vmem>>, vector<1x16x128xbf16>
    %1 = vector.shape_cast %0 : vector<1x16x128xbf16> to vector<16x128xbf16>
    %c0_2 = arith.constant 0 : index
    %c16 = arith.constant 16 : index
    %c0_3 = arith.constant 0 : index
    %2 = vector.load %arg1[%c0_2, %c16, %c0_3] : memref<1x24x128xbf16, #tpu.memory_space<vmem>>, vector<1x8x16xbf16>
    %3 = vector.shape_cast %2 : vector<1x8x16xbf16> to vector<8x16xbf16>
    %4 = arith.extf %3 : vector<8x16xbf16> to vector<8x16xf32>
    %c0_4 = arith.constant 0 : index
    %c0_5 = arith.constant 0 : index
    %5 = vector.load %arg2[%c0_4, %c0_5] : memref<136x128xf32, #tpu.memory_space<vmem>>, vector<8x128xf32>
    %c8 = arith.constant 8 : index
    %c0_6 = arith.constant 0 : index
    %6 = vector.load %arg2[%c8, %c0_6] : memref<136x128xf32, #tpu.memory_space<vmem>>, vector<64x128xf32>
    %c72 = arith.constant 72 : index
    %c0_7 = arith.constant 0 : index
    %7 = vector.load %arg2[%c72, %c0_7] : memref<136x128xf32, #tpu.memory_space<vmem>>, vector<32x128xf32>
    %c104 = arith.constant 104 : index
    %c0_8 = arith.constant 0 : index
    %8 = vector.load %arg2[%c104, %c0_8] : memref<136x128xf32, #tpu.memory_space<vmem>>, vector<32x16xf32>
    %9 = vector.extract_strided_slice %5 {offsets = [0, 0], sizes = [1, 128], strides = [1, 1]} : vector<8x128xf32> to vector<1x128xf32>
    %10 = vector.extract_strided_slice %5 {offsets = [1, 0], sizes = [1, 128], strides = [1, 1]} : vector<8x128xf32> to vector<1x128xf32>
    %11 = vector.extract_strided_slice %5 {offsets = [2, 0], sizes = [1, 128], strides = [1, 1]} : vector<8x128xf32> to vector<1x128xf32>
    %12 = vector.extract_strided_slice %5 {offsets = [3, 0], sizes = [1, 128], strides = [1, 1]} : vector<8x128xf32> to vector<1x128xf32>
    %13 = vector.extract_strided_slice %5 {offsets = [4, 0], sizes = [1, 128], strides = [1, 1]} : vector<8x128xf32> to vector<1x128xf32>
    %14 = vector.extract_strided_slice %5 {offsets = [5, 0], sizes = [1, 128], strides = [1, 1]} : vector<8x128xf32> to vector<1x128xf32>
    %15 = vector.extract_strided_slice %5 {offsets = [6, 0], sizes = [1, 1], strides = [1, 1]} : vector<8x128xf32> to vector<1x1xf32>
    %16 = vector.extract_strided_slice %5 {offsets = [7, 0], sizes = [1, 128], strides = [1, 1]} : vector<8x128xf32> to vector<1x128xf32>
    %c0_9 = arith.constant 0 : index
    %c0_10 = arith.constant 0 : index
    %17 = vector.load %arg3[%c0_9, %c0_10] : memref<128x256xbf16, #tpu.memory_space<vmem>>, vector<128x256xbf16>
    %cst = arith.constant dense<0.000000e+00> : vector<16x256xf32>
    %18 = tpu.matmul %1, %17, %cst {dimension_numbers = #tpu.dot_dimension_numbers<[1], [0], [0], [1], [0, 0, 1, 1], [], []>} : vector<16x128xbf16>, vector<128x256xbf16>, vector<16x256xf32> -> vector<16x256xf32>
    %19 = vector.extract_strided_slice %18 {offsets = [0, 0], sizes = [16, 128], strides = [1, 1]} : vector<16x256xf32> to vector<16x128xf32>
    %20 = vector.broadcast %9 : vector<1x128xf32> to vector<16x128xf32>
    %21 = arith.addf %19, %20 : vector<16x128xf32>
    %22 = vector.extract_strided_slice %18 {offsets = [0, 128], sizes = [8, 128], strides = [1, 1]} : vector<16x256xf32> to vector<8x128xf32>
    %23 = vector.broadcast %10 : vector<1x128xf32> to vector<8x128xf32>
    %24 = arith.addf %22, %23 : vector<8x128xf32>
    %cst_11 = arith.constant dense<0.000000e+00> : vector<64x16xf32>
    %25 = tpu.matmul %6, %21, %cst_11 {dimension_numbers = #tpu.dot_dimension_numbers<[1], [1], [0], [0], [0, 0, 1, 0], [], []>} : vector<64x128xf32>, vector<16x128xf32>, vector<64x16xf32> -> vector<64x16xf32>
    %26 = vector.extract_strided_slice %25 {offsets = [0, 0], sizes = [32, 16], strides = [1, 1]} : vector<64x16xf32> to vector<32x16xf32>
    %27 = vector.extract_strided_slice %25 {offsets = [32, 0], sizes = [32, 16], strides = [1, 1]} : vector<64x16xf32> to vector<32x16xf32>
    %28 = arith.mulf %27, %8 : vector<32x16xf32>
    %cst_12 = arith.constant dense<0.000000e+00> : vector<32xf32>
    %29 = vector.multi_reduction <add>, %28, %cst_12 [1] : vector<32x16xf32> to vector<32xf32>
    %30 = vector.shape_cast %29 : vector<32xf32> to vector<32x1xf32>
    %31 = vector.broadcast %30 : vector<32x1xf32> to vector<32x16xf32>
    %32 = arith.addf %26, %31 : vector<32x16xf32>
    %cst_13 = arith.constant 2.000000e-01 : f32
    %33 = vector.broadcast %cst_13 : f32 to vector<32x16xf32>
    %34 = arith.mulf %33, %32 : vector<32x16xf32>
    %35 = arith.maximumf %32, %34 : vector<32x16xf32>
    %36 = tpu.concatenate %4, %4, %4, %4 in 0 : vector<8x16xf32>, vector<8x16xf32>, vector<8x16xf32>, vector<8x16xf32> -> vector<32x16xf32>
    %37 = arith.addf %35, %36 : vector<32x16xf32>
    %cst_14 = arith.constant dense<0xFF800000> : vector<32xf32>
    %38 = vector.multi_reduction <maximumf>, %37, %cst_14 [1] : vector<32x16xf32> to vector<32xf32>
    %39 = vector.shape_cast %38 : vector<32xf32> to vector<32x1xf32>
    %40 = vector.broadcast %39 : vector<32x1xf32> to vector<32x16xf32>
    %41 = arith.subf %37, %40 : vector<32x16xf32>
    %42 = math.exp %41 : vector<32x16xf32>
    %cst_15 = arith.constant dense<0.000000e+00> : vector<32xf32>
    %43 = vector.multi_reduction <add>, %42, %cst_15 [1] : vector<32x16xf32> to vector<32xf32>
    %44 = vector.shape_cast %43 : vector<32xf32> to vector<32x1xf32>
    %45 = tpu.reciprocal %44 {approx = true} : vector<32x1xf32> -> vector<32x1xf32>
    %46 = vector.broadcast %45 : vector<32x1xf32> to vector<32x16xf32>
    %47 = arith.mulf %42, %46 : vector<32x16xf32>
    %cst_16 = arith.constant dense<0.000000e+00> : vector<32x128xf32>
    %48 = tpu.matmul %47, %21, %cst_16 {dimension_numbers = #tpu.dot_dimension_numbers<[1], [0], [0], [1], [0, 0, 1, 1], [], []>} : vector<32x16xf32>, vector<16x128xf32>, vector<32x128xf32> -> vector<32x128xf32>
    %49 = arith.mulf %48, %7 : vector<32x128xf32>
    %50 = vector.extract_strided_slice %49 {offsets = [0, 0], sizes = [8, 128], strides = [1, 1]} : vector<32x128xf32> to vector<8x128xf32>
    %51 = vector.extract_strided_slice %49 {offsets = [8, 0], sizes = [8, 128], strides = [1, 1]} : vector<32x128xf32> to vector<8x128xf32>
    %52 = arith.addf %50, %51 : vector<8x128xf32>
    %53 = vector.extract_strided_slice %49 {offsets = [16, 0], sizes = [8, 128], strides = [1, 1]} : vector<32x128xf32> to vector<8x128xf32>
    %54 = arith.addf %52, %53 : vector<8x128xf32>
    %55 = vector.extract_strided_slice %49 {offsets = [24, 0], sizes = [8, 128], strides = [1, 1]} : vector<32x128xf32> to vector<8x128xf32>
    %56 = arith.addf %54, %55 : vector<8x128xf32>
    %57 = vector.broadcast %13 : vector<1x128xf32> to vector<8x128xf32>
    %58 = arith.mulf %56, %57 : vector<8x128xf32>
    %cst_17 = arith.constant dense<0.000000e+00> : vector<8xf32>
    %59 = vector.multi_reduction <add>, %58, %cst_17 [1] : vector<8x128xf32> to vector<8xf32>
    %60 = vector.shape_cast %59 : vector<8xf32> to vector<8x1xf32>
    %61 = vector.broadcast %14 : vector<1x128xf32> to vector<8x128xf32>
    %62 = arith.mulf %24, %61 : vector<8x128xf32>
    %cst_18 = arith.constant dense<0.000000e+00> : vector<8xf32>
    %63 = vector.multi_reduction <add>, %62, %cst_18 [1] : vector<8x128xf32> to vector<8xf32>
    %64 = vector.shape_cast %63 : vector<8xf32> to vector<8x1xf32>
    %65 = arith.addf %60, %64 : vector<8x1xf32>
    %66 = vector.broadcast %15 : vector<1x1xf32> to vector<8x1xf32>
    %67 = arith.addf %65, %66 : vector<8x1xf32>
    %68 = arith.negf %67 : vector<8x1xf32>
    %69 = math.exp %68 : vector<8x1xf32>
    %cst_19 = arith.constant 1.000000e+00 : f32
    %70 = vector.broadcast %cst_19 : f32 to vector<8x1xf32>
    %71 = arith.addf %70, %69 : vector<8x1xf32>
    %72 = arith.divf %70, %71 : vector<8x1xf32>
    %73 = arith.subf %56, %24 : vector<8x128xf32>
    %74 = vector.broadcast %72 : vector<8x1xf32> to vector<8x128xf32>
    %75 = arith.mulf %74, %73 : vector<8x128xf32>
    %76 = arith.addf %24, %75 : vector<8x128xf32>
    %cst_20 = arith.constant dense<0.000000e+00> : vector<8xf32>
    %77 = vector.multi_reduction <add>, %76, %cst_20 [1] : vector<8x128xf32> to vector<8xf32>
    %78 = vector.shape_cast %77 : vector<8xf32> to vector<8x1xf32>
    %79 = arith.mulf %76, %76 : vector<8x128xf32>
    %cst_21 = arith.constant dense<0.000000e+00> : vector<8xf32>
    %80 = vector.multi_reduction <add>, %79, %cst_21 [1] : vector<8x128xf32> to vector<8xf32>
    %81 = vector.shape_cast %80 : vector<8xf32> to vector<8x1xf32>
    %cst_22 = arith.constant 7.812500e-03 : f32
    %82 = vector.broadcast %cst_22 : f32 to vector<8x1xf32>
    %83 = arith.mulf %78, %82 : vector<8x1xf32>
    %cst_23 = arith.constant 7.812500e-03 : f32
    %84 = vector.broadcast %cst_23 : f32 to vector<8x1xf32>
    %85 = arith.mulf %81, %84 : vector<8x1xf32>
    %86 = arith.mulf %83, %83 : vector<8x1xf32>
    %87 = arith.subf %85, %86 : vector<8x1xf32>
    %88 = vector.broadcast %83 : vector<8x1xf32> to vector<8x128xf32>
    %89 = arith.subf %76, %88 : vector<8x128xf32>
    %cst_24 = arith.constant 9.99999974E-6 : f32
    %90 = vector.broadcast %cst_24 : f32 to vector<8x1xf32>
    %91 = arith.addf %87, %90 : vector<8x1xf32>
    %92 = math.rsqrt %91 : vector<8x1xf32>
    %93 = vector.broadcast %92 : vector<8x1xf32> to vector<8x128xf32>
    %94 = arith.mulf %89, %93 : vector<8x128xf32>
    %95 = vector.broadcast %11 : vector<1x128xf32> to vector<8x128xf32>
    %96 = arith.mulf %94, %95 : vector<8x128xf32>
    %97 = vector.broadcast %12 : vector<1x128xf32> to vector<8x128xf32>
    %98 = arith.addf %96, %97 : vector<8x128xf32>
    %cst_25 = arith.constant 0.000000e+00 : f32
    %99 = vector.broadcast %cst_25 : f32 to vector<8x128xf32>
    %100 = arith.cmpf oge, %98, %99 : vector<8x128xf32>
    %101 = vector.broadcast %16 : vector<1x128xf32> to vector<8x128xf32>
    %102 = arith.mulf %101, %98 : vector<8x128xf32>
    %103 = arith.select %100, %98, %102 : vector<8x128xi1>, vector<8x128xf32>
    %c0_26 = arith.constant 0 : index
    %c0_27 = arith.constant 0 : index
    %c0_28 = arith.constant 0 : index
    %104 = vector.load %arg4[%c0_26, %c0_27, %c0_28] : memref<1x8x128xf32, #tpu.memory_space<vmem>>, vector<1x8x128xf32>
    %105 = vector.shape_cast %104 : vector<1x8x128xf32> to vector<8x128xf32>
    %106 = vector.shape_cast %103 : vector<8x128xf32> to vector<1x8x128xf32>
    tpu.vector_store %arg4[%c0_26, %c0_27, %c0_28], %106 {strides = array<i32>} : memref<1x8x128xf32, #tpu.memory_space<vmem>>, vector<1x8x128xf32>,
    return
  }
  func.func @transform_0(%arg0: i32) -> (i32, i32, i32) {
    %c0_i32 = arith.constant 0 : i32
    %c0_i32_0 = arith.constant 0 : i32
    %c0_i32_1 = arith.constant 0 : i32
    return %arg0, %c0_i32, %c0_i32_0 : i32, i32, i32
  }
  func.func @transform_1(%arg0: i32) -> (i32, i32) {
    %c0_i32 = arith.constant 0 : i32
    %c0_i32_0 = arith.constant 0 : i32
    %c0_i32_1 = arith.constant 0 : i32
    return %c0_i32, %c0_i32_0 : i32, i32
  }
  func.func @transform_2(%arg0: i32) -> (i32, i32) {
    %c0_i32 = arith.constant 0 : i32
    %c0_i32_0 = arith.constant 0 : i32
    %c0_i32_1 = arith.constant 0 : i32
    return %c0_i32, %c0_i32_0 : i32, i32
  }
  func.func @transform_3(%arg0: i32) -> (i32, i32, i32) {
    %c0_i32 = arith.constant 0 : i32
    %c0_i32_0 = arith.constant 0 : i32
    %c0_i32_1 = arith.constant 0 : i32
    return %arg0, %c0_i32, %c0_i32_0 : i32, i32, i32
  }
}

</mosaic_0001>

<llo_original>
// kernel: gat_forward.1
$region0: #{gat_forward.1}
  #allocation0 [shape = 'u32[]', space=smem, size = 0x4, offset = 0x4, fixed_abs, tag = 'smem constant byte address 0x4 - core index']
  #allocation1 [shape = 'u32[144,128]{1,0:T(1,128)}', space=vmem, size = 0x12000, scoped, tag = 'internal scratch']
  %s0 = inlined_call_operand.vmem [shape: bf16[4,24,128], index: 0, kind: input, shape index: {}]
  %s1 = inlined_call_operand.vmem [shape: f32[136,128], index: 1, kind: input, shape index: {}]
  %s2 = inlined_call_operand.hbm [shape: bf16[128,256], index: 2, kind: input, shape index: {}]
  %s3 = inlined_call_operand.hbm [shape: f32[4,8,128], index: 3, kind: output, shape index: {}]
  %s4 = sld [smem:[#allocation0]]
  $region49: #{gat_forward.1} parent=0
    _
  %s6 = ssub.s32 1, %s4
  %s7 = scalar_select 0, %s6, %s4
  $region1: #{gat_forward.1} parent=0
    #allocation2 [shape = 'u8[65536]{0}', space=vmem, size = 0x10000, scoped, tag = 'input window, operand 2, single buffered']
    #allocation3 [shape = 's32[2]{0}', space=sflag, size = 0x8, scoped, tag = 'scoped memory for gat_forward.1']
    #allocation4 [shape = 's32[2]{0}', space=sflag, size = 0x8, scoped, tag = 'scoped memory for gat_forward.1']
    #allocation5 [shape = 'u8[8192]{0}', space=vmem, size = 0x2000, scoped, tag = 'output window, operand 0']
    %8 = vsyncpa [#allocation3], 0
    %9 = vsyncpa [#allocation4], 0
    %s10 = scalar_lea.sflag [#allocation4], 1
    %11 = vsyncpa %s10, 0
    loop: start=0, step=1, limit=6
    $region2: #{gat_forward.1} parent=1 // loop_pre_header
      _
    $region3: #{gat_forward.1} parent=1 // loop_header
      %s13 = sphi 0, %s17
      %p14 = scmp.ge.s32.totalorder %s13, 6
      %s23 = sphi 0, %s25
      %s26 = sphi 0, %s23
      %s27 = sphi 0, %s26
      %s43 = sphi 0, %s27
      %s47 = sphi 0, %s47
      %s49 = sphi 0, %s47
      %s50 = sphi 0, %s49
      %s64 = sphi 0, %s50
      %s68 = sphi 0, %s68
      %s70 = sphi 0, %s68
      %s71 = sphi 0, %s70
      %s85 = sphi 0, %s71
      %s91 = sphi 0, %s93
      %s94 = sphi 0, %s91
      %s95 = sphi 0, %s94
      %s111 = sphi 0, %s95
    $region4: #{gat_forward.1} parent=1 // loop_header_branch
      %16 = sbr.rel (%p14) target = $region8
    $region5: #{gat_forward.1} parent=1 // loop_body
      %s18 = ssub.s32 %s13, 1
      %s19 = ssub.s32 %s13, 2
      %s20 = sadd.s32 %s13, 1
      %s21 = ssub.s32 %s13, %s20
      %p22 = scmp.eq.s32.totalorder %s21, 0
      %s24 = sadd.s32 %s23, 1
      %s25 = scalar_select %p22, %s23, %s24
      %p28 = pneg %p22
      %p29 = scmp.eq.s32.totalorder %s13, 3
      %p30 = por %p28, %p29
      %p31 = scmp.ne.s32.totalorder %s23, %s26
      %p32 = scmp.eq.s32.totalorder %s13, 0
      %p33 = por %p31, %p32
      %p34 = scmp.ne.s32.totalorder %s23, %s26
      %p35 = scmp.eq.s32.totalorder %s18, 3
      %p36 = por %p34, %p35
      %p37 = scmp.ne.s32.totalorder %s26, %s27
      %p38 = scmp.eq.s32.totalorder %s18, 0
      %p39 = por %p37, %p38
      %p40 = scmp.ne.s32.totalorder %s26, %s27
      %p41 = scmp.eq.s32.totalorder %s19, 3
      %p42 = por %p40, %p41
      %p44 = scmp.ne.s32.totalorder %s27, %s43
      %p45 = scmp.eq.s32.totalorder %s19, 0
      %p46 = por %p44, %p45
      %s48 = sadd.s32 %s47, 1
      %p51 = scmp.eq.s32.totalorder %s13, 3
      %p52 = scmp.ne.s32.totalorder %s47, %s49
      %p53 = scmp.eq.s32.totalorder %s13, 0
      %p54 = por %p52, %p53
      %p55 = scmp.ne.s32.totalorder %s47, %s49
      %p56 = scmp.eq.s32.totalorder %s18, 3
      %p57 = por %p55, %p56
      %p58 = scmp.ne.s32.totalorder %s49, %s50
      %p59 = scmp.eq.s32.totalorder %s18, 0
      %p60 = por %p58, %p59
      %p61 = scmp.ne.s32.totalorder %s49, %s50
      %p62 = scmp.eq.s32.totalorder %s19, 3
      %p63 = por %p61, %p62
      %p65 = scmp.ne.s32.totalorder %s50, %s64
      %p66 = scmp.eq.s32.totalorder %s19, 0
      %p67 = por %p65, %p66
      %s69 = sadd.s32 %s68, 1
      %p72 = scmp.eq.s32.totalorder %s13, 3
      %p73 = scmp.ne.s32.totalorder %s68, %s70
      %p74 = scmp.eq.s32.totalorder %s13, 0
      %p75 = por %p73, %p74
      %p76 = scmp.ne.s32.totalorder %s68, %s70
      %p77 = scmp.eq.s32.totalorder %s18, 3
      %p78 = por %p76, %p77
      %p79 = scmp.ne.s32.totalorder %s70, %s71
      %p80 = scmp.eq.s32.totalorder %s18, 0
      %p81 = por %p79, %p80
      %p82 = scmp.ne.s32.totalorder %s70, %s71
      %p83 = scmp.eq.s32.totalorder %s19, 3
      %p84 = por %p82, %p83
      %p86 = scmp.ne.s32.totalorder %s71, %s85
      %p87 = scmp.eq.s32.totalorder %s19, 0
      %p88 = por %p86, %p87
      %s89 = ssub.s32 %s13, %s20
      %p90 = scmp.eq.s32.totalorder %s89, 0
      %s92 = sadd.s32 %s91, 1
      %s93 = scalar_select %p90, %s91, %s92
      %p96 = pneg %p90
      %p97 = scmp.eq.s32.totalorder %s13, 3
      %p98 = por %p96, %p97
      %p99 = scmp.ne.s32.totalorder %s91, %s94
      %p100 = scmp.eq.s32.totalorder %s13, 0
      %p101 = por %p99, %p100
      %p102 = scmp.ne.s32.totalorder %s91, %s94
      %p103 = scmp.eq.s32.totalorder %s18, 3
      %p104 = por %p102, %p103
      %p105 = scmp.ne.s32.totalorder %s94, %s95
      %p106 = scmp.eq.s32.totalorder %s18, 0
      %p107 = por %p105, %p106
      %p108 = scmp.ne.s32.totalorder %s94, %s95
      %p109 = scmp.eq.s32.totalorder %s19, 3
      %p110 = por %p108, %p109
      %p112 = scmp.ne.s32.totalorder %s95, %s111
      %p113 = scmp.eq.s32.totalorder %s19, 0
      %p114 = por %p112, %p113
      %p115 = scmp.le.s32.totalorder 1, %s13
      %p116 = scmp.lt.s32.totalorder %s13, 5
      %p117 = pnand %p115, %p116
      %p118 = pneg %p117
      // Predicated region
      $region9: #{gat_forward.1} parent=5 // pred_check
        _
      $region10: #{gat_forward.1} parent=5 // pred_check_branch
        %120 = sbr.rel (%p117) target = $region12
      $region11: #{gat_forward.1} parent=5 // pred_region
        %s121 = ssub.s32 %s13, 1
        // Predicated region
        $region13: #{gat_forward.1} parent=11 // pred_check
          %p122 = pneg %p60
        $region14: #{gat_forward.1} parent=11 // pred_check_branch
          %124 = sbr.rel (%p122) target = $region16
        $region15: #{gat_forward.1} parent=11 // pred_region
          _
        $region16: #{gat_forward.1} parent=11 // pred_fallthru
          _
        // Predicated region
        $region17: #{gat_forward.1} parent=11 // pred_check
          %p125 = pneg %p81
        $region18: #{gat_forward.1} parent=11 // pred_check_branch
          %127 = sbr.rel (%p125) target = $region20
        $region19: #{gat_forward.1} parent=11 // pred_region
          %s129 = ssub.s32 2048, 2048
          %130 = vsyncadd [#allocation3], %s129
          %s131 = sshll.u32 [#allocation2], 4
          %s132 = int_to_ptr.vmem [resolvable:$true] %s131
          %137 = dma.hbm_to_vmem [thread:$0]  %s2, 2048, %s132, [#allocation3], 128, 128, 8
        $region20: #{gat_forward.1} parent=11 // pred_fallthru
          _
      $region12: #{gat_forward.1} parent=5 // pred_fallthru
        _
      %p138 = scmp.lt.s32.totalorder %s13, 4
      // Predicated region
      $region21: #{gat_forward.1} parent=5 // pred_check
        %p139 = pneg %p138
      $region22: #{gat_forward.1} parent=5 // pred_check_branch
        %141 = sbr.rel (%p139) target = $region24
      $region23: #{gat_forward.1} parent=5 // pred_region
        // Predicated region
        $region25: #{gat_forward.1} parent=23 // pred_check
          %p142 = pneg %p33
        $region26: #{gat_forward.1} parent=23 // pred_check_branch
          %144 = sbr.rel (%p142) target = $region28
        $region27: #{gat_forward.1} parent=23 // pred_region
          %p145 = scmp.lt.s32.totalorder %s13, 3
          %s146 = scalar_select %p145, %s13, 3
          %s147 = smul.addr %s146, 3
          %s148 = smul.addr %s147, 4
          %s149 = scalar_lea.vmem %s0, %s148
        $region28: #{gat_forward.1} parent=23 // pred_fallthru
          _
      $region24: #{gat_forward.1} parent=5 // pred_fallthru
        _
      %p150 = scmp.le.s32.totalorder 1, %s13
      %p151 = scmp.lt.s32.totalorder %s13, 5
      %p152 = pnand %p150, %p151
      %p153 = pneg %p152
      // Predicated region
      $region29: #{gat_forward.1} parent=5 // pred_check
        _
      $region30: #{gat_forward.1} parent=5 // pred_check_branch
        %155 = sbr.rel (%p152) target = $region32
      $region31: #{gat_forward.1} parent=5 // pred_region
        %s156 = ssub.s32 %s13, 1
        // Predicated region
        $region33: #{gat_forward.1} parent=31 // pred_check
          %p157 = pneg %p81
        $region34: #{gat_forward.1} parent=31 // pred_check_branch
          %159 = sbr.rel (%p157) target = $region36
        $region35: #{gat_forward.1} parent=31 // pred_region
          %160 = dma.done [#allocation3], 2048
        $region36: #{gat_forward.1} parent=31 // pred_fallthru
          _
        %p161 = scmp.lt.s32.totalorder %s18, 3
        %s162 = scalar_select %p161, %s18, 3
        %s163 = smul.addr %s162, 3
        %s164 = smul.addr %s163, 4
        %s165 = scalar_lea.vmem %s0, %s164
        %p166 = pneg %p39
        %p167 = pneg %p36
        %p168 = pneg %p60
        %p169 = pneg %p57
        %p170 = pneg %p81
        %p171 = pneg %p78
        %p172 = pneg %p107
        %p173 = pneg %p104
        %s174 = sand.u32 %s94, 1
        %s175 = scalar_lea.sflag [#allocation4], %s174
        %s176 = sand.u32 %s94, 1
        %s177 = smul.addr %s176, 8
        %s178 = scalar_lea.vmem [#allocation5], %s177
        %p179 = scmp.lt.s32.totalorder %s18, 3
        %s180 = scalar_select %p179, %s18, 3
        %s181 = smul.addr %s180, 3
        %s182 = smul.addr %s181, 4
        %s183 = scalar_lea.vmem %s0, %s182
        %v185 = vld [vmem:[%s183] sm:$0xf]
        %v186 = vld [vmem:[%s183 + $0x4] sm:$0xf]
        %v187 = vld [vmem:[%s183 + $0x8] sm:$0xf]
        %v188 = vunpack.c.l.bf16 %v187
        %v189 = vld [vmem:[%s1] sm:$0xff]
        %v190 = vld [vmem:[%s1 + $0x8] sm:$0xff]
        %v191 = vld [vmem:[%s1 + $0x10] sm:$0xff]
        %v192 = vld [vmem:[%s1 + $0x18] sm:$0xff]
        %v193 = vld [vmem:[%s1 + $0x20] sm:$0xff]
        %v194 = vld [vmem:[%s1 + $0x28] sm:$0xff]
        %v195 = vld [vmem:[%s1 + $0x30] sm:$0xff]
        %v196 = vld [vmem:[%s1 + $0x38] sm:$0xff]
        %v197 = vld [vmem:[%s1 + $0x40] sm:$0xff]
        %v198 = vld [vmem:[%s1 + $0x48] sm:$0xff]
        %v199 = vld [vmem:[%s1 + $0x50] sm:$0xff]
        %v200 = vld [vmem:[%s1 + $0x58] sm:$0xff]
        %v201 = vld [vmem:[%s1 + $0x60] sm:$0xff]
        %v202 = vld [vmem:[%s1 + $0x68] sm:$0xff]
        %v203 = vld [vmem:[%s1 + $0x70] sm:$0xff]
        %v204 = vld [vmem:[%s1 + $0x78] sm:$0xff]
        %v205 = vld [vmem:[%s1 + $0x80] sm:$0xff]
        %v206 = vld [vmem:[#allocation2] sm:$0xff]
        %v207 = vld [vmem:[#allocation2 + $0x8] sm:$0xff]
        %v208 = vld [vmem:[#allocation2 + $0x10] sm:$0xff]
        %v209 = vld [vmem:[#allocation2 + $0x18] sm:$0xff]
        %v210 = vld [vmem:[#allocation2 + $0x20] sm:$0xff]
        %v211 = vld [vmem:[#allocation2 + $0x28] sm:$0xff]
        %v212 = vld [vmem:[#allocation2 + $0x30] sm:$0xff]
        %v213 = vld [vmem:[#allocation2 + $0x38] sm:$0xff]
        %v214 = vld [vmem:[#allocation2 + $0x40] sm:$0xff]
        %v215 = vld [vmem:[#allocation2 + $0x48] sm:$0xff]
        %v216 = vld [vmem:[#allocation2 + $0x50] sm:$0xff]
        %v217 = vld [vmem:[#allocation2 + $0x58] sm:$0xff]
        %v218 = vld [vmem:[#allocation2 + $0x60] sm:$0xff]
        %v219 = vld [vmem:[#allocation2 + $0x68] sm:$0xff]
        %v220 = vld [vmem:[#allocation2 + $0x70] sm:$0xff]
        %v221 = vld [vmem:[#allocation2 + $0x78] sm:$0xff]
        %v224 = vunpack.c.l.b16 %v185
        %v225 = vunpack.c.l.b16 %v186
        %v226 = vpack.c.b16 %v225, %v224
        %v244 = vunpack.c.l.b16 %v206
        %v245 = vunpack.c.h.b16 %v206
        %v246 = vunpack.c.l.b16 %v207
        %v247 = vunpack.c.h.b16 %v207
        %v248 = vunpack.c.l.b16 %v208
        %v249 = vunpack.c.h.b16 %v208
        %v250 = vunpack.c.l.b16 %v209
        %v251 = vunpack.c.h.b16 %v209
        %v252 = vunpack.c.l.b16 %v210
        %v253 = vunpack.c.h.b16 %v210
        %v254 = vunpack.c.l.b16 %v211
        %v255 = vunpack.c.h.b16 %v211
        %v256 = vunpack.c.l.b16 %v212
        %v257 = vunpack.c.h.b16 %v212
        %v258 = vunpack.c.l.b16 %v213
        %v259 = vunpack.c.h.b16 %v213
        %v260 = vunpack.c.l.b16 %v214
        %v261 = vunpack.c.h.b16 %v214
        %v262 = vunpack.c.l.b16 %v215
        %v263 = vunpack.c.h.b16 %v215
        %v264 = vunpack.c.l.b16 %v216
        %v265 = vunpack.c.h.b16 %v216
        %v266 = vunpack.c.l.b16 %v217
        %v267 = vunpack.c.h.b16 %v217
        %v268 = vunpack.c.l.b16 %v218
        %v269 = vunpack.c.h.b16 %v218
        %v270 = vunpack.c.l.b16 %v219
        %v271 = vunpack.c.h.b16 %v219
        %v272 = vunpack.c.l.b16 %v220
        %v273 = vunpack.c.h.b16 %v220
        %v274 = vunpack.c.l.b16 %v221
        %v275 = vunpack.c.h.b16 %v221
        %v276 = vpack.c.b16 %v246, %v244
        %v277 = vpack.c.b16 %v247, %v245
        %v278 = vpack.c.b16 %v250, %v248
        %v279 = vpack.c.b16 %v251, %v249
        %v280 = vpack.c.b16 %v254, %v252
        %v281 = vpack.c.b16 %v255, %v253
        %v282 = vpack.c.b16 %v258, %v256
        %v283 = vpack.c.b16 %v259, %v257
        %v284 = vpack.c.b16 %v262, %v260
        %v285 = vpack.c.b16 %v263, %v261
        %v286 = vpack.c.b16 %v266, %v264
        %v287 = vpack.c.b16 %v267, %v265
        %v288 = vpack.c.b16 %v270, %v268
        %v289 = vpack.c.b16 %v271, %v269
        %v290 = vpack.c.b16 %v274, %v272
        %v291 = vpack.c.b16 %v275, %v273
        %308 = vmatprep.subr.bf16.mxu0 %v277
        %309 = vmatpush1.bf16.msra.mxu0 %v276
        %310 = vmatprep.subr.bf16.mxu0 %v279
        %311 = vmatpush1.bf16.msra.mxu0 %v278
        %312 = vmatprep.subr.bf16.mxu0 %v281
        %313 = vmatpush1.bf16.msra.mxu0 %v280
        %314 = vmatprep.subr.bf16.mxu0 %v283
        %315 = vmatpush1.bf16.msra.mxu0 %v282
        %316 = vmatprep.subr.bf16.mxu0 %v285
        %317 = vmatpush1.bf16.msra.mxu0 %v284
        %318 = vmatprep.subr.bf16.mxu0 %v287
        %319 = vmatpush1.bf16.msra.mxu0 %v286
        %320 = vmatprep.subr.bf16.mxu0 %v289
        %321 = vmatpush1.bf16.msra.mxu0 %v288
        %322 = vmatprep.subr.bf16.mxu0 %v291
        %323 = vmatpush1.bf16.msra.mxu0 %v290
        %324 = vmatprep.subr.bf16.mxu0 0
        %325 = vmatpush1.bf16.msra.mxu0 0
        %326 = vmatprep.subr.bf16.mxu0 0
        %327 = vmatpush1.bf16.msra.mxu0 0
        %328 = vmatprep.subr.bf16.mxu0 0
        %329 = vmatpush1.bf16.msra.mxu0 0
        %330 = vmatprep.subr.bf16.mxu0 0
        %331 = vmatpush1.bf16.msra.mxu0 0
        %332 = vmatprep.subr.bf16.mxu0 0
        %333 = vmatpush1.bf16.msra.mxu0 0
        %334 = vmatprep.subr.bf16.mxu0 0
        %335 = vmatpush1.bf16.msra.mxu0 0
        %336 = vmatprep.subr.bf16.mxu0 0
        %337 = vmatpush1.bf16.msra.mxu0 0
        %338 = vmatprep.subr.bf16.mxu0 0
        %339 = vmatpush1.bf16.msra.mxu0 0
        %340 = vmatprep.mubr.bf16.mxu0 0
        %341 = vmatmul.mubr.bf16.gmra.mrb[0].mxu0 %v226
        %v342 = vpop.f32.mrb[0].mxu0
        %v343 = vadd.f32 0.0, %v342
        %v344 = vpop.f32.mrb[0].mxu0
        %v345 = vadd.f32 0.0, %v344
        %v346 = vpop.f32.mrb[0].mxu0
        %v347 = vadd.f32 0.0, %v346
        %v348 = vpop.f32.mrb[0].mxu0
        %349 = vdwg.mxu0
        %v350 = vlaneseq
        %v351 = vshrl.u32 %v350, 7
        %v352 = vsub.s32 0, %v351
        %v353 = vrot.slane %v189, %v352
        %v354 = vadd.f32 %v343, %v353
        %v355 = vadd.f32 %v347, %v353
        %v356 = vlaneseq
        %v357 = vshrl.u32 %v356, 7
        %v358 = vsub.s32 1, %v357
        %v359 = vrot.slane %v189, %v358
        %v360 = vadd.f32 %v345, %v359
        %361 = vmatprep.subr.mxu0 0.0
        %362 = vmatpush1.xpose.msra.mxu0 %v354
        %363 = vmatprep.subr.mxu0 0.0
        %364 = vmatpush1.xpose.msra.mxu0 %v355
        %365 = vmatprep.subr.mxu0 0.0
        %366 = vmatpush1.xpose.msra.mxu0 0.0
        %367 = vmatprep.subr.mxu0 0.0
        %368 = vmatpush1.xpose.msra.mxu0 0.0
        %369 = vmatprep.subr.mxu0 0.0
        %370 = vmatpush1.xpose.msra.mxu0 0.0
        %371 = vmatprep.subr.mxu0 0.0
        %372 = vmatpush1.xpose.msra.mxu0 0.0
        %373 = vmatprep.subr.mxu0 0.0
        %374 = vmatpush1.xpose.msra.mxu0 0.0
        %375 = vmatprep.subr.mxu0 0.0
        %376 = vmatpush1.xpose.msra.mxu0 0.0
        %377 = vmatprep.subr.mxu0 0.0
        %378 = vmatpush1.xpose.msra.mxu0 0.0
        %379 = vmatprep.subr.mxu0 0.0
        %380 = vmatpush1.xpose.msra.mxu0 0.0
        %381 = vmatprep.subr.mxu0 0.0
        %382 = vmatpush1.xpose.msra.mxu0 0.0
        %383 = vmatprep.subr.mxu0 0.0
        %384 = vmatpush1.xpose.msra.mxu0 0.0
        %385 = vmatprep.subr.mxu0 0.0
        %386 = vmatpush1.xpose.msra.mxu0 0.0
        %387 = vmatprep.subr.mxu0 0.0
        %388 = vmatpush1.xpose.msra.mxu0 0.0
        %389 = vmatprep.subr.mxu0 0.0
        %390 = vmatpush1.xpose.msra.mxu0 0.0
        %391 = vmatprep.subr.mxu0 0.0
        %392 = vmatpush1.xpose.msra.mxu0 0.0
        %393 = vmatprep.subr.mxu0 0.0
        %394 = vmatpush1.xpose.msra.mxu0 0.0
        %395 = vmatprep.subr.mxu0 0.0
        %396 = vmatpush1.xpose.msra.mxu0 0.0
        %397 = vmatprep.subr.mxu0 0.0
        %398 = vmatpush1.xpose.msra.mxu0 0.0
        %399 = vmatprep.subr.mxu0 0.0
        %400 = vmatpush1.xpose.msra.mxu0 0.0
        %401 = vmatprep.subr.mxu0 0.0
        %402 = vmatpush1.xpose.msra.mxu0 0.0
        %403 = vmatprep.subr.mxu0 0.0
        %404 = vmatpush1.xpose.msra.mxu0 0.0
        %405 = vmatprep.subr.mxu0 0.0
        %406 = vmatpush1.xpose.msra.mxu0 0.0
        %407 = vmatprep.subr.mxu0 0.0
        %408 = vmatpush1.xpose.msra.mxu0 0.0
        %409 = vmatprep.subr.mxu0 0.0
        %410 = vmatpush1.xpose.msra.mxu0 0.0
        %411 = vmatprep.subr.mxu0 0.0
        %412 = vmatpush1.xpose.msra.mxu0 0.0
        %413 = vmatprep.subr.mxu0 0.0
        %414 = vmatpush1.xpose.msra.mxu0 0.0
        %415 = vmatprep.subr.mxu0 0.0
        %416 = vmatpush1.xpose.msra.mxu0 0.0
        %417 = vmatprep.subr.mxu0 0.0
        %418 = vmatpush1.xpose.msra.mxu0 0.0
        %419 = vmatprep.subr.mxu0 0.0
        %420 = vmatpush1.xpose.msra.mxu0 0.0
        %421 = vmatprep.subr.mxu0 0.0
        %422 = vmatpush1.xpose.msra.mxu0 0.0
        %423 = vmatprep.subr.mxu0 0.0
        %424 = vmatpush1.xpose.msra.mxu0 0.0
        %425 = vmatprep.mubr.f32.mxu0 0.0
        %426 = vmatmul.mubr.f32.gmra.mrb[0].mxu0 %v190
        %v427 = vpop.f32.mrb[0].mxu0
        %v428 = vadd.f32 0.0, %v427
        %v429 = vpop.f32.mrb[0].mxu0
        %430 = vmatprep.mubr.f32.mxu0 0.0
        %431 = vmatmul.mubr.f32.gmra.mrb[0].mxu0 %v191
        %v432 = vpop.f32.mrb[0].mxu0
        %v433 = vadd.f32 0.0, %v432
        %v434 = vpop.f32.mrb[0].mxu0
        %435 = vmatprep.mubr.f32.mxu0 0.0
        %436 = vmatmul.mubr.f32.gmra.mrb[0].mxu0 %v192
        %v437 = vpop.f32.mrb[0].mxu0
        %v438 = vadd.f32 0.0, %v437
        %v439 = vpop.f32.mrb[0].mxu0
        %440 = vmatprep.mubr.f32.mxu0 0.0
        %441 = vmatmul.mubr.f32.gmra.mrb[0].mxu0 %v193
        %v442 = vpop.f32.mrb[0].mxu0
        %v443 = vadd.f32 0.0, %v442
        %v444 = vpop.f32.mrb[0].mxu0
        %445 = vmatprep.mubr.f32.mxu0 0.0
        %446 = vmatmul.mubr.f32.gmra.mrb[0].mxu0 %v194
        %v447 = vpop.f32.mrb[0].mxu0
        %v448 = vadd.f32 0.0, %v447
        %v449 = vpop.f32.mrb[0].mxu0
        %450 = vmatprep.mubr.f32.mxu0 0.0
        %451 = vmatmul.mubr.f32.gmra.mrb[0].mxu0 %v195
        %v452 = vpop.f32.mrb[0].mxu0
        %v453 = vadd.f32 0.0, %v452
        %v454 = vpop.f32.mrb[0].mxu0
        %455 = vmatprep.mubr.f32.mxu0 0.0
        %456 = vmatmul.mubr.f32.gmra.mrb[0].mxu0 %v196
        %v457 = vpop.f32.mrb[0].mxu0
        %v458 = vadd.f32 0.0, %v457
        %v459 = vpop.f32.mrb[0].mxu0
        %460 = vmatprep.mubr.f32.mxu0 0.0
        %461 = vmatmul.mubr.f32.gmra.mrb[0].mxu0 %v197
        %v462 = vpop.f32.mrb[0].mxu0
        %v463 = vadd.f32 0.0, %v462
        %v464 = vpop.f32.mrb[0].mxu0
        %465 = vdwg.mxu0
        %v466 = vmul.f32 %v448, %v202
        %v467 = vmul.f32 %v453, %v203
        %v468 = vmul.f32 %v458, %v204
        %v469 = vmul.f32 %v463, %v205
        %vm470 = vcmask 130048
        %v471 = vsel %vm470, %v466, 0.0
        %472 = vadd.xlane.f32.xlu0 %v471
        %v473 = vpop.xlane.xlu0 %472
        %v474 = vsel %vm470, %v467, 0.0
        %475 = vadd.xlane.f32.xlu0 %v474
        %v476 = vpop.xlane.xlu0 %475
        %v477 = vsel %vm470, %v468, 0.0
        %478 = vadd.xlane.f32.xlu0 %v477
        %v479 = vpop.xlane.xlu0 %478
        %v480 = vsel %vm470, %v469, 0.0
        %481 = vadd.xlane.f32.xlu0 %v480
        %v482 = vpop.xlane.xlu0 %481
        %v483 = vadd.f32 %v428, %v473
        %v484 = vadd.f32 %v433, %v476
        %v485 = vadd.f32 %v438, %v479
        %v486 = vadd.f32 %v443, %v482
        %v487 = vmul.f32 %v483, 0.2
        %v488 = vmul.f32 %v484, 0.2
        %v489 = vmul.f32 %v485, 0.2
        %v490 = vmul.f32 %v486, 0.2
        %v491 = vmax.f32 %v483, %v487
        %v492 = vmax.f32 %v484, %v488
        %v493 = vmax.f32 %v485, %v489
        %v494 = vmax.f32 %v486, %v490
        %v495 = vadd.f32 %v491, %v188
        %v496 = vadd.f32 %v492, %v188
        %v497 = vadd.f32 %v493, %v188
        %v498 = vadd.f32 %v494, %v188
        %v499 = vsel %vm470, %v495, -inf
        %500 = vmax.xlane.f32.xlu0 %v499
        %v501 = vpop.xlane.xlu0 %500
        %v502 = vsel %vm470, %v496, -inf
        %503 = vmax.xlane.f32.xlu0 %v502
        %v504 = vpop.xlane.xlu0 %503
        %v505 = vsel %vm470, %v497, -inf
        %506 = vmax.xlane.f32.xlu0 %v505
        %v507 = vpop.xlane.xlu0 %506
        %v508 = vsel %vm470, %v498, -inf
        %509 = vmax.xlane.f32.xlu0 %v508
        %v510 = vpop.xlane.xlu0 %509
        %v511 = vsub.f32 %v495, %v501
        %v512 = vsub.f32 %v496, %v504
        %v513 = vsub.f32 %v497, %v507
        %v514 = vsub.f32 %v498, %v510
        %v515 = vmul.f32 %v511, 1.442695
        %v516 = vpow.pop %v515
        %v517 = vmul.f32 %v512, 1.442695
        %v518 = vpow.pop %v517
        %v519 = vmul.f32 %v513, 1.442695
        %v520 = vpow.pop %v519
        %v521 = vmul.f32 %v514, 1.442695
        %v522 = vpow.pop %v521
        %v523 = vsel %vm470, %v516, 0.0
        %524 = vadd.xlane.f32.xlu0 %v523
        %v525 = vpop.xlane.xlu0 %524
        %v526 = vsel %vm470, %v518, 0.0
        %527 = vadd.xlane.f32.xlu0 %v526
        %v528 = vpop.xlane.xlu0 %527
        %v529 = vsel %vm470, %v520, 0.0
        %530 = vadd.xlane.f32.xlu0 %v529
        %v531 = vpop.xlane.xlu0 %530
        %v532 = vsel %vm470, %v522, 0.0
        %533 = vadd.xlane.f32.xlu0 %v532
        %v534 = vpop.xlane.xlu0 %533
        %v535 = vrcp.pop %v525
        %v536 = vrcp.pop %v528
        %v537 = vrcp.pop %v531
        %v538 = vrcp.pop %v534
        %v539 = vmul.f32 %v516, %v535
        %v540 = vmul.f32 %v518, %v536
        %v541 = vmul.f32 %v520, %v537
        %v542 = vmul.f32 %v522, %v538
        %v544 = vsel %vm470, %v539, 0
        %v547 = vsel %vm470, %v540, 0
        %v550 = vsel %vm470, %v541, 0
        %v553 = vsel %vm470, %v542, 0
        %555 = vmatprep.subr.mxu0 0.0
        %556 = vmatpush1.msra.mxu0 %v354
        %557 = vmatprep.subr.mxu0 0.0
        %558 = vmatpush1.msra.mxu0 %v355
        %559 = vmatprep.subr.mxu0 0.0
        %560 = vmatpush1.msra.mxu0 0.0
        %561 = vmatprep.subr.mxu0 0.0
        %562 = vmatpush1.msra.mxu0 0.0
        %563 = vmatprep.subr.mxu0 0.0
        %564 = vmatpush1.msra.mxu0 0.0
        %565 = vmatprep.subr.mxu0 0.0
        %566 = vmatpush1.msra.mxu0 0.0
        %567 = vmatprep.subr.mxu0 0.0
        %568 = vmatpush1.msra.mxu0 0.0
        %569 = vmatprep.subr.mxu0 0.0
        %570 = vmatpush1.msra.mxu0 0.0
        %571 = vmatprep.subr.mxu0 0.0
        %572 = vmatpush1.msra.mxu0 0.0
        %573 = vmatprep.subr.mxu0 0.0
        %574 = vmatpush1.msra.mxu0 0.0
        %575 = vmatprep.subr.mxu0 0.0
        %576 = vmatpush1.msra.mxu0 0.0
        %577 = vmatprep.subr.mxu0 0.0
        %578 = vmatpush1.msra.mxu0 0.0
        %579 = vmatprep.subr.mxu0 0.0
        %580 = vmatpush1.msra.mxu0 0.0
        %581 = vmatprep.subr.mxu0 0.0
        %582 = vmatpush1.msra.mxu0 0.0
        %583 = vmatprep.subr.mxu0 0.0
        %584 = vmatpush1.msra.mxu0 0.0
        %585 = vmatprep.subr.mxu0 0.0
        %586 = vmatpush1.msra.mxu0 0.0
        %587 = vmatprep.subr.mxu0 0.0
        %588 = vmatpush1.msra.mxu0 0.0
        %589 = vmatprep.subr.mxu0 0.0
        %590 = vmatpush1.msra.mxu0 0.0
        %591 = vmatprep.subr.mxu0 0.0
        %592 = vmatpush1.msra.mxu0 0.0
        %593 = vmatprep.subr.mxu0 0.0
        %594 = vmatpush1.msra.mxu0 0.0
        %595 = vmatprep.subr.mxu0 0.0
        %596 = vmatpush1.msra.mxu0 0.0
        %597 = vmatprep.subr.mxu0 0.0
        %598 = vmatpush1.msra.mxu0 0.0
        %599 = vmatprep.subr.mxu0 0.0
        %600 = vmatpush1.msra.mxu0 0.0
        %601 = vmatprep.subr.mxu0 0.0
        %602 = vmatpush1.msra.mxu0 0.0
        %603 = vmatprep.subr.mxu0 0.0
        %604 = vmatpush1.msra.mxu0 0.0
        %605 = vmatprep.subr.mxu0 0.0
        %606 = vmatpush1.msra.mxu0 0.0
        %607 = vmatprep.subr.mxu0 0.0
        %608 = vmatpush1.msra.mxu0 0.0
        %609 = vmatprep.subr.mxu0 0.0
        %610 = vmatpush1.msra.mxu0 0.0
        %611 = vmatprep.subr.mxu0 0.0
        %612 = vmatpush1.msra.mxu0 0.0
        %613 = vmatprep.subr.mxu0 0.0
        %614 = vmatpush1.msra.mxu0 0.0
        %615 = vmatprep.subr.mxu0 0.0
        %616 = vmatpush1.msra.mxu0 0.0
        %617 = vmatprep.subr.mxu0 0.0
        %618 = vmatpush1.msra.mxu0 0.0
        %619 = vmatprep.mubr.f32.mxu0 0.0
        %620 = vmatmul.mubr.f32.gmra.mrb[0].mxu0 %v544
        %v621 = vpop.f32.mrb[0].mxu0
        %v622 = vadd.f32 0.0, %v621
        %v623 = vpop.f32.mrb[0].mxu0
        %624 = vmatprep.mubr.f32.mxu0 0.0
        %625 = vmatmul.mubr.f32.gmra.mrb[0].mxu0 %v547
        %v626 = vpop.f32.mrb[0].mxu0
        %v627 = vadd.f32 0.0, %v626
        %v628 = vpop.f32.mrb[0].mxu0
        %629 = vmatprep.mubr.f32.mxu0 0.0
        %630 = vmatmul.mubr.f32.gmra.mrb[0].mxu0 %v550
        %v631 = vpop.f32.mrb[0].mxu0
        %v632 = vadd.f32 0.0, %v631
        %v633 = vpop.f32.mrb[0].mxu0
        %634 = vmatprep.mubr.f32.mxu0 0.0
        %635 = vmatmul.mubr.f32.gmra.mrb[0].mxu0 %v553
        %v636 = vpop.f32.mrb[0].mxu0
        %v637 = vadd.f32 0.0, %v636
        %v638 = vpop.f32.mrb[0].mxu0
        %639 = vdwg.mxu0
        %v640 = vmul.f32 %v622, %v198
        %v641 = vmul.f32 %v627, %v199
        %v642 = vmul.f32 %v632, %v200
        %v643 = vmul.f32 %v637, %v201
        %v644 = vadd.f32 %v640, %v641
        %v645 = vadd.f32 %v644, %v642
        %v646 = vadd.f32 %v645, %v643
        %v647 = vlaneseq
        %v648 = vshrl.u32 %v647, 7
        %v649 = vsub.s32 4, %v648
        %v650 = vrot.slane %v189, %v649
        %v651 = vmul.f32 %v646, %v650
        %652 = vadd.xlane.f32.xlu0 %v651
        %v653 = vpop.xlane.xlu0 %652
        %v654 = vlaneseq
        %v655 = vshrl.u32 %v654, 7
        %v656 = vsub.s32 5, %v655
        %v657 = vrot.slane %v189, %v656
        %v658 = vmul.f32 %v360, %v657
        %659 = vadd.xlane.f32.xlu0 %v658
        %v660 = vpop.xlane.xlu0 %659
        %v661 = vadd.f32 %v653, %v660
        %v662 = vlaneseq
        %v663 = vshrl.u32 %v662, 7
        %v664 = vsub.s32 6, %v663
        %v665 = vrot.slane %v189, %v664
        %v666 = vadd.f32 %v661, %v665
        %v667 = vxor.u32 %v666, 2147483648
        %v668 = vmul.f32 %v667, 1.442695
        %v669 = vpow.pop %v668
        %v670 = vadd.f32 %v669, 1.0
        %v671 = vrcp.pop %v670
        %v672 = vmul.f32 1.0, %v671
        %v673 = vsub.f32 %v646, %v360
        %675 = vset.pattern.permute.xlu0 0
        %676 = vperm.xlu0 %675, %v672
        %v677 = vpop.permute.xlu0 %676
        %v679 = vmul.f32 %v677, %v673
        %v680 = vadd.f32 %v360, %v679
        %681 = vadd.xlane.f32.xlu0 %v680
        %v682 = vpop.xlane.xlu0 %681
        %v683 = vmul.f32 %v680, %v680
        %684 = vadd.xlane.f32.xlu0 %v683
        %v685 = vpop.xlane.xlu0 %684
        %v686 = vmul.f32 %v682, 0.0078125
        %v687 = vmul.f32 %v685, 0.0078125
        %v688 = vmul.f32 %v686, %v686
        %v689 = vsub.f32 %v687, %v688
        %v690 = vsub.f32 %v680, %v686
        %v691 = vadd.f32 %v689, 1e-05
        %v692 = vrsqrt.pop %v691
        %v693 = vmul.f32 %v690, %v692
        %v694 = vlaneseq
        %v695 = vshrl.u32 %v694, 7
        %v696 = vsub.s32 2, %v695
        %v697 = vrot.slane %v189, %v696
        %v698 = vmul.f32 %v693, %v697
        %v699 = vlaneseq
        %v700 = vshrl.u32 %v699, 7
        %v701 = vsub.s32 3, %v700
        %v702 = vrot.slane %v189, %v701
        %v703 = vadd.f32 %v698, %v702
        %vm704 = vcmp.ge.f32.partialorder %v703, 0.0
        %v705 = vlaneseq
        %v706 = vshrl.u32 %v705, 7
        %v707 = vsub.s32 7, %v706
        %v708 = vrot.slane %v189, %v707
        %v709 = vmul.f32 %v708, %v703
        %v710 = vsel %vm704, %v703, %v709
        %711 = vst [vmem:[%s178] sm:$0xff] %v710
        %s712 = sand.u32 %s94, 1
        %s713 = scalar_lea.sflag [#allocation4], %s712
        %s714 = sand.u32 %s94, 1
        %s715 = smul.addr %s714, 8
        %s716 = scalar_lea.vmem [#allocation5], %s715
        // Predicated region
        $region37: #{gat_forward.1} parent=31 // pred_check
          %p717 = pneg %p104
        $region38: #{gat_forward.1} parent=31 // pred_check_branch
          %719 = sbr.rel (%p717) target = $region40
        $region39: #{gat_forward.1} parent=31 // pred_region
          %s721 = ssub.s32 128, 128
          %722 = vsyncadd %s713, %s721
          %s723 = smul.addr %s18, 128
          %s724 = scalar_lea.hbm %s3, %s723
          %s726 = sshll.u32 %s716, 4
          %s727 = int_to_ptr.vmem [resolvable:$true] %s726
          %729 = dma.vmem_to_hbm [thread:$0]  %s727, 128, %s724, %s713
        $region40: #{gat_forward.1} parent=31 // pred_fallthru
          _
      $region32: #{gat_forward.1} parent=5 // pred_fallthru
        _
      %p730 = scmp.le.s32.totalorder 2, %s13
      // Predicated region
      $region41: #{gat_forward.1} parent=5 // pred_check
        %p731 = pneg %p730
      $region42: #{gat_forward.1} parent=5 // pred_check_branch
        %733 = sbr.rel (%p731) target = $region44
      $region43: #{gat_forward.1} parent=5 // pred_region
        %s734 = ssub.s32 %s13, 2
        // Predicated region
        $region45: #{gat_forward.1} parent=43 // pred_check
          %p735 = pneg %p110
        $region46: #{gat_forward.1} parent=43 // pred_check_branch
          %737 = sbr.rel (%p735) target = $region48
        $region47: #{gat_forward.1} parent=43 // pred_region
          %s738 = sand.u32 %s95, 1
          %s739 = scalar_lea.sflag [#allocation4], %s738
          %s740 = sand.u32 %s95, 1
          %s741 = smul.addr %s740, 8
          %s742 = scalar_lea.vmem [#allocation5], %s741
          %743 = dma.done %s739, 128
        $region48: #{gat_forward.1} parent=43 // pred_fallthru
          _
      $region44: #{gat_forward.1} parent=5 // pred_fallthru
        _
    $region6: #{gat_forward.1} parent=1 // loop_footer
      %s17 = sadd.s32 1, %s13
    $region7: #{gat_forward.1} parent=1 // loop_footer_branch
      %12 = sbr.rel target = $region3
    $region8: #{gat_forward.1} parent=1 // loop_exit
      _
    %744 = vsyncpa [#allocation3], 1
    %s745 = scalar_lea.sflag [#allocation3], 1
    %746 = vsyncpa %s745, 1
    %747 = vsyncpa [#allocation4], 1
    %s748 = scalar_lea.sflag [#allocation4], 1
    %749 = vsyncpa %s748, 1

</llo_original>
